<compile_context>
chip_gen: v6e
topology: v6e:2x2x1
jax: 0.10.0
libtpu: 0.0.40
codegen_flags: <defaults>
</compile_context>

<pallas_src>
import functools

import jax
import jax.numpy as jnp
from jax import lax
from jax.experimental import pallas as pl
from jax.experimental.pallas import tpu as pltpu


_LANE = 512                       # lane-dense slab width (multiple of 128 lanes)
_MAX_BLOCK_ROWS = 2048            # (2048, 512) f32 block = 4 MiB per input per buffer
_VMEM_LIMIT = 32 * 1024 * 1024    # explicit: v5e's default scoped VMEM is only 16 MiB


def _round_up(a, b):
    return -(-a // b) * b


def _sublane_rows(dtype):
    # Minimum legal sublane multiple for a block's second-to-last dim.
    return {4: 8, 2: 16, 1: 32}.get(jnp.dtype(dtype).itemsize, 8)


def _mse_partial_kernel(x_ref, t_ref, p_ref, *, valid_rows, rows_per_iter):
    """One grid step: writes its (1, 1, LANE) partial sum of (x - t)^2."""
    tm, lane = x_ref.shape

    def sq_diff(x, t, row0):
        x = x.astype(jnp.float32)
        t = t.astype(jnp.float32)
        d = x - t
        d2 = d * d
        if valid_rows is not None:
            # Ragged last block: rows past the end of the slab hold unspecified
            # data -> zero them before reducing (select, so NaNs can't leak).
            row = row0 + lax.broadcasted_iota(jnp.int32, (d2.shape[0], 1), 0)
            d2 = jnp.where(row < valid_rows, d2, 0.0)
        return d2

    if tm > rows_per_iter and tm % rows_per_iter == 0:
        # Streaming path: accumulate rows_per_iter-row chunks into a 4-vreg
        # (8, LANE) f32 accumulator so the (tm, LANE) intermediate is never
        # materialized (bounded live ranges, no VMEM round trip / spills).
        base = pl.program_id(0) * tm

        def body(k, acc):
            r0 = pl.multiple_of(k * rows_per_iter, rows_per_iter)
            d2 = sq_diff(x_ref[pl.ds(r0, rows_per_iter), :],
                         t_ref[pl.ds(r0, rows_per_iter), :],
                         base + r0)
            # (rpi, LANE) -> (rpi//8, 8, LANE) is a layout-preserving sublane
            # grouping; the leading-axis sum is pure VALU work.
            return acc + jnp.sum(d2.reshape(rows_per_iter // 8, 8, lane), axis=0)

        acc = lax.fori_loop(0, tm // rows_per_iter, body,
                            jnp.zeros((8, lane), jnp.float32), unroll=4)
        partial = jnp.sum(acc, axis=0, keepdims=True)   # one XLU sublane reduce
    else:
        # Small / full-extent block: direct computation.
        d2 = sq_diff(x_ref[...], t_ref[...], pl.program_id(0) * tm)
        partial = jnp.sum(d2, axis=0, keepdims=True)

    p_ref[...] = partial.reshape(1, 1, lane)


def _mse_partial_sums(x2, t2, *, max_block_rows=_MAX_BLOCK_ROWS):
    """Pallas reduction over a (rows, LANE) slab -> (grid, 1, LANE) partials."""
    rows, lane = x2.shape
    assert lane == _LANE and t2.shape == x2.shape
    rpi = max(_sublane_rows(x2.dtype), _sublane_rows(t2.dtype))
    cap = max(rpi, (max_block_rows // rpi) * rpi)

    if rows <= 2 * rpi:
        # Single block equal to the full array dims (legal even when rows is
        # not a sublane multiple).
        tm, grid, valid_rows = rows, 1, None
    else:
        # Cap the tile at ~half the rows so grid >= 2: lets the "parallel"
        # axis shard steps across both TensorCores on v7x (no-op on v5e/v6e).
        half = _round_up(-(-rows // 2), rpi)
        tm = min(cap, half)
        grid = -(-rows // tm)
        valid_rows = rows if rows % tm else None

    kernel = functools.partial(_mse_partial_kernel,
                               valid_rows=valid_rows, rows_per_iter=rpi)

    bytes_in = rows * lane * (jnp.dtype(x2.dtype).itemsize
                              + jnp.dtype(t2.dtype).itemsize)
    cost = pl.CostEstimate(flops=3 * rows * lane, transcendentals=0,
                           bytes_accessed=bytes_in + grid * lane * 4)

    return pl.pallas_call(
        kernel,
        out_shape=jax.ShapeDtypeStruct((grid, 1, _LANE), jnp.float32),
        grid_spec=pltpu.PrefetchScalarGridSpec(
            num_scalar_prefetch=0,
            grid=(grid,),
            in_specs=[pl.BlockSpec((tm, _LANE), lambda i: (i, 0)),
                      pl.BlockSpec((tm, _LANE), lambda i: (i, 0))],
            out_specs=pl.BlockSpec((1, 1, _LANE), lambda i: (i, 0, 0)),
        ),
        compiler_params=pltpu.CompilerParams(
            dimension_semantics=("parallel",),
            vmem_limit_bytes=_VMEM_LIMIT,
        ),
        cost_estimate=cost,
    )(x2, t2)


def _prepare_slab(a):
    """Flatten (bitcast) and split into a (rows, LANE) aligned prefix plus a
    <LANE ragged tail.  For LANE-aligned sizes (the common case for feature
    maps) this is a pure zero-copy reshape -- no jnp.pad, no extra HBM traffic."""
    flat = a.reshape(-1)
    total = flat.shape[0]
    rows = total // _LANE
    n_main = rows * _LANE
    if n_main == total:
        return flat.reshape(rows, _LANE), flat[:0]
    # Rare unaligned case: the prefix slice may cost one prefix copy (still far
    # cheaper than padding both full arrays every call); the <512-element tail
    # is reduced with plain jnp.
    return flat[:n_main].reshape(rows, _LANE), flat[n_main:]


def _mse_forward(total, x_main, x_tail, t_main, t_tail):
    acc = jnp.float32(0.0)
    if x_main.shape[0] > 0:
        acc = acc + jnp.sum(_mse_partial_sums(x_main, t_main))
    if x_tail.shape[0] > 0:
        d = x_tail.astype(jnp.float32) - t_tail.astype(jnp.float32)
        acc = acc + jnp.sum(d * d)
    return (acc / jnp.float32(total)).astype(jnp.float32)


@functools.partial(jax.custom_vjp, nondiff_argnums=(0,))
def _mse_prepared(total, x_main, x_tail, t_main, t_tail):
    return _mse_forward(total, x_main, x_tail, t_main, t_tail)


def _mse_fwd(total, x_main, x_tail, t_main, t_tail):
    out = _mse_forward(total, x_main, x_tail, t_main, t_tail)
    return out, (x_main, x_tail, t_main, t_tail)


def _mse_bwd(total, res, g):
    x_main, x_tail, t_main, t_tail = res
    scale = (2.0 / total) * g
    d_main = (x_main.astype(jnp.float32) - t_main.astype(jnp.float32)) * scale
    d_tail = (x_tail.astype(jnp.float32) - t_tail.astype(jnp.float32)) * scale
    # Target cotangents are plain negations; when unused (frozen target behind
    # stop_gradient) XLA DCEs them, so no extra HBM write is paid.
    return (d_main.astype(x_main.dtype), d_tail.astype(x_tail.dtype),
            (-d_main).astype(t_main.dtype), (-d_tail).astype(t_tail.dtype))


_mse_prepared.defvjp(_mse_fwd, _mse_bwd)


def mse_loss_pallas(x, target):
    """Scalar mean((x - target)^2); the main reduction runs in the Pallas kernel."""
    if x.shape != target.shape:
        raise ValueError(f"shape mismatch: {x.shape} vs {target.shape}")
    x_main, x_tail = _prepare_slab(x)
    t_main, t_tail = _prepare_slab(target)
    return _mse_prepared(int(x.size), x_main, x_tail, t_main, t_tail)


class ContentLoss:
    """JAX/Pallas port of the PyTorch ContentLoss module."""

    def __init__(self, target):
        target = lax.stop_gradient(target)          # target.detach()
        self.target = target
        # Target never changes: prepare its lane-dense slab once and reuse it.
        self._t_main, self._t_tail = _prepare_slab(target)
        self._total = int(target.size)
        # F.mse_loss(target, target) == 0.0
        self.loss = jnp.float32(0.0)

    def __call__(self, x):
        if x.shape != self.target.shape:
            raise ValueError(f"shape mismatch: {x.shape} vs {self.target.shape}")
        x_main, x_tail = _prepare_slab(x)
        # NOTE: mutating self.loss is a Python side effect; under jax.jit of a
        # larger graph it holds the traced value (same caveat as the PyTorch
        # module's stateful .loss attribute).
        self.loss = _mse_prepared(self._total, x_main, x_tail,
                                  self._t_main, self._t_tail)
        return x  # forward returns input unchanged


if __name__ == "__main__":
    key = jax.random.PRNGKey(0)
    ks = jax.random.split(key, 10)

    # Small NCHW feature map consistent with the module (single-block path).
    shape = (2, 4, 16, 16)
    target = jax.random.normal(ks[0], shape, dtype=jnp.float32)
    x = jax.random.normal(ks[1], shape, dtype=jnp.float32)

    module = ContentLoss(target)
    out = jax.block_until_ready(module(x))
    loss = jax.block_until_ready(module.loss)

    # Pass-through check.
    assert out.shape == x.shape and bool(jnp.all(out == x))

    # Reference MSE check.
    ref = jnp.mean((x - target) ** 2)
    assert jnp.allclose(loss, ref, rtol=1e-5, atol=1e-6), (loss, ref)

    # Gradient check (custom VJP): d/dx mean((x-t)^2) = 2*(x-t)/N.
    g = jax.block_until_ready(jax.grad(lambda a: mse_loss_pallas(a, target))(x))
    g_ref = 2.0 * (x - target) / x.size
    assert jnp.allclose(g, g_ref, rtol=1e-5, atol=1e-6)

    def check(shape, dtype, k0, k1):
        t = jax.random.normal(k0, shape, dtype=jnp.float32).astype(dtype)
        a = jax.random.normal(k1, shape, dtype=jnp.float32).astype(dtype)
        got = jax.block_until_ready(mse_loss_pallas(a, t))
        want = jnp.mean((a.astype(jnp.float32) - t.astype(jnp.float32)) ** 2)
        assert jnp.allclose(got, want, rtol=1e-5, atol=1e-6), (shape, dtype, got, want)

    # Multi-block streaming path (grid=2, fori_loop accumulation).
    check((4, 8, 32, 32), jnp.float32, ks[2], ks[3])
    # Ragged last row-block (grid=2 with in-kernel row mask).
    check((5, 4, 16, 32), jnp.float32, ks[4], ks[5])
    # Non-LANE-aligned total: aligned prefix through the kernel + tiny jnp tail.
    check((3, 5, 7, 11), jnp.float32, ks[6], ks[7])
    # bf16 inputs: 16-row sublane multiple, f32 in-kernel accumulation.
    check((4, 8, 32, 32), jnp.bfloat16, ks[8], ks[9])

    print("KERNEL_OK")
</pallas_src>

<mosaic_0001>
module attributes {stable_mosaic.version = 11 : i64} {
  func.func @_mse_partial_kernel(%arg0: i32, %arg1: memref<4x512xf32, #tpu.memory_space<vmem>>, %arg2: memref<4x512xf32, #tpu.memory_space<vmem>>, %arg3: memref<1x1x512xf32, #tpu.memory_space<vmem>>) attributes {dimension_semantics = [#tpu.dimension_semantics<parallel>], iteration_bounds = array<i64: 1>, scalar_prefetch = 0 : i64, scratch_operands = 0 : i64, tpu.core_type = #tpu.core_type<tc>, window_params = [{transform_indices = @transform_0, window_bounds = array<i64: 4, 512>}, {transform_indices = @transform_1, window_bounds = array<i64: 4, 512>}, {transform_indices = @transform_2, window_bounds = array<i64: 1, 1, 512>}]} {
    %c0 = arith.constant 0 : index
    %c0_0 = arith.constant 0 : index
    %0 = vector.load %arg1[%c0, %c0_0] : memref<4x512xf32, #tpu.memory_space<vmem>>, vector<4x512xf32>
    %c0_1 = arith.constant 0 : index
    %c0_2 = arith.constant 0 : index
    %1 = vector.load %arg2[%c0_1, %c0_2] : memref<4x512xf32, #tpu.memory_space<vmem>>, vector<4x512xf32>
    %2 = arith.subf %0, %1 : vector<4x512xf32>
    %3 = arith.mulf %2, %2 : vector<4x512xf32>
    %cst = arith.constant dense<0.000000e+00> : vector<512xf32>
    %4 = vector.multi_reduction <add>, %3, %cst [0] : vector<4x512xf32> to vector<512xf32>
    %5 = vector.shape_cast %4 : vector<512xf32> to vector<1x512xf32>
    %6 = vector.shape_cast %5 : vector<1x512xf32> to vector<1x1x512xf32>
    %c0_3 = arith.constant 0 : index
    %c0_4 = arith.constant 0 : index
    %c0_5 = arith.constant 0 : index
    %7 = vector.load %arg3[%c0_3, %c0_4, %c0_5] : memref<1x1x512xf32, #tpu.memory_space<vmem>>, vector<1x1x512xf32>
    tpu.vector_store %arg3[%c0_3, %c0_4, %c0_5], %6 {strides = array<i32>} : memref<1x1x512xf32, #tpu.memory_space<vmem>>, vector<1x1x512xf32>,
    return
  }
  func.func @transform_0(%arg0: i32) -> (i32, i32) {
    %c0_i32 = arith.constant 0 : i32
    %c0_i32_0 = arith.constant 0 : i32
    return %arg0, %c0_i32 : i32, i32
  }
  func.func @transform_1(%arg0: i32) -> (i32, i32) {
    %c0_i32 = arith.constant 0 : i32
    %c0_i32_0 = arith.constant 0 : i32
    return %arg0, %c0_i32 : i32, i32
  }
  func.func @transform_2(%arg0: i32) -> (i32, i32, i32) {
    %c0_i32 = arith.constant 0 : i32
    %c0_i32_0 = arith.constant 0 : i32
    %c0_i32_1 = arith.constant 0 : i32
    return %arg0, %c0_i32, %c0_i32_0 : i32, i32, i32
  }
}

</mosaic_0001>

<llo_original>
// kernel: tpu_custom_call.1
$region0: #{tpu_custom_call.1}
  #allocation0 [shape = 'u32[]', space=smem, size = 0x4, offset = 0x4, fixed_abs, tag = 'smem constant byte address 0x4 - core index']
  #allocation1 [shape = 'u32[144,128]{1,0:T(1,128)}', space=vmem, size = 0x12000, scoped, tag = 'internal scratch']
  %s0 = inlined_call_operand.hbm [shape: f32[4,512], index: 0, kind: input, shape index: {}]
  %s1 = inlined_call_operand.hbm [shape: f32[4,512], index: 1, kind: input, shape index: {}]
  %s2 = inlined_call_operand.hbm [shape: f32[1,1,512], index: 2, kind: output, shape index: {}]
  %s3 = sld [smem:[#allocation0]]
  $region26: #{tpu_custom_call.1} parent=0
    _
  %s5 = ssub.s32 1, %s3
  %s6 = scalar_select 0, %s5, %s3
  $region1: #{tpu_custom_call.1} parent=0
    #allocation2 [shape = 'u8[8192]{0}', space=vmem, size = 0x2000, scoped, tag = 'input window, operand 0, single buffered']
    #allocation3 [shape = 's32[1]{0}', space=sflag, size = 0x4, scoped, tag = 'scoped memory for tpu_custom_call.1']
    #allocation4 [shape = 's32[1]{0}', space=sflag, size = 0x4, scoped, tag = 'scoped memory for tpu_custom_call.1']
    #allocation5 [shape = 'u8[8192]{0}', space=vmem, size = 0x2000, scoped, tag = 'input window, operand 1, single buffered']
    #allocation6 [shape = 's32[1]{0}', space=sflag, size = 0x4, scoped, tag = 'scoped memory for tpu_custom_call.1']
    #allocation7 [shape = 'u8[2048]{0}', space=vmem, size = 0x800, scoped, tag = 'output window, operand 0, single buffered']
    %7 = vsyncpa [#allocation3], 0
    %8 = vsyncpa [#allocation6], 0
    %9 = vsyncpa [#allocation4], 0
    // Predicated region
    $region2: #{tpu_custom_call.1} parent=1 // pred_check
      _
    $region3: #{tpu_custom_call.1} parent=1 // pred_check_branch
      %11 = sbr.rel (0) target = $region5
    $region4: #{tpu_custom_call.1} parent=1 // pred_region
      %s13 = ssub.s32 256, 256
      %14 = vsyncadd [#allocation3], %s13
      %s16 = sshll.u32 [#allocation2], 4
      %s17 = int_to_ptr.vmem [resolvable:$true] %s16
      %19 = dma.hbm_to_vmem [thread:$0]  %s0, 256, %s17, [#allocation3]
    $region5: #{tpu_custom_call.1} parent=1 // pred_fallthru
      _
    // Predicated region
    $region6: #{tpu_custom_call.1} parent=1 // pred_check
      _
    $region7: #{tpu_custom_call.1} parent=1 // pred_check_branch
      %21 = sbr.rel (0) target = $region9
    $region8: #{tpu_custom_call.1} parent=1 // pred_region
      %s23 = ssub.s32 256, 256
      %24 = vsyncadd [#allocation6], %s23
      %s26 = sshll.u32 [#allocation5], 4
      %s27 = int_to_ptr.vmem [resolvable:$true] %s26
      %29 = dma.hbm_to_vmem [thread:$0]  %s1, 256, %s27, [#allocation6]
    $region9: #{tpu_custom_call.1} parent=1 // pred_fallthru
      _
    // Predicated region
    $region10: #{tpu_custom_call.1} parent=1 // pred_check
      _
    $region11: #{tpu_custom_call.1} parent=1 // pred_check_branch
      %31 = sbr.rel (0) target = $region13
    $region12: #{tpu_custom_call.1} parent=1 // pred_region
      %32 = dma.done [#allocation3], 256
    $region13: #{tpu_custom_call.1} parent=1 // pred_fallthru
      _
    // Predicated region
    $region14: #{tpu_custom_call.1} parent=1 // pred_check
      _
    $region15: #{tpu_custom_call.1} parent=1 // pred_check_branch
      %34 = sbr.rel (0) target = $region17
    $region16: #{tpu_custom_call.1} parent=1 // pred_region
      %35 = dma.done [#allocation6], 256
    $region17: #{tpu_custom_call.1} parent=1 // pred_fallthru
      _
    %v36 = vld [vmem:[#allocation2] sm:$0xff]
    %v37 = vld [vmem:[#allocation2 + $0x8] sm:$0xff]
    %v38 = vld [vmem:[#allocation5] sm:$0xff]
    %v39 = vld [vmem:[#allocation5 + $0x8] sm:$0xff]
    %v40 = vsub.f32 %v36, %v38
    %v41 = vsub.f32 %v37, %v39
    %v42 = vmul.f32 %v40, %v40
    %v43 = vmul.f32 %v41, %v41
    %v46 = vcombine.high %v42, %v42
    %v47 = vcombine.high %v43, %v43
    %vm50 = vcmask 1043456
    %v51 = vsel %vm50, %v42, 0.0
    %v52 = vrot.slane %v51, 4
    %v53 = vadd.f32 %v51, %v52
    %v54 = vrot.slane %v53, 2
    %v55 = vadd.f32 %v53, %v54
    %v56 = vrot.slane %v55, 1
    %v57 = vadd.f32 %v55, %v56
    %v58 = vsel %vm50, %v46, 0.0
    %v59 = vrot.slane %v58, 4
    %v60 = vadd.f32 %v58, %v59
    %v61 = vrot.slane %v60, 2
    %v62 = vadd.f32 %v60, %v61
    %v63 = vrot.slane %v62, 1
    %v64 = vadd.f32 %v62, %v63
    %v65 = vsel %vm50, %v43, 0.0
    %v66 = vrot.slane %v65, 4
    %v67 = vadd.f32 %v65, %v66
    %v68 = vrot.slane %v67, 2
    %v69 = vadd.f32 %v67, %v68
    %v70 = vrot.slane %v69, 1
    %v71 = vadd.f32 %v69, %v70
    %v72 = vsel %vm50, %v47, 0.0
    %v73 = vrot.slane %v72, 4
    %v74 = vadd.f32 %v72, %v73
    %v75 = vrot.slane %v74, 2
    %v76 = vadd.f32 %v74, %v75
    %v77 = vrot.slane %v76, 1
    %v78 = vadd.f32 %v76, %v77
    %v83 = vcombine.low %v57, %v64
    %v84 = vcombine.low %v71, %v78
    %v86 = vunpack.c.l.s4 1966171168
    %v87 = vunpack.c.0.s8 %v86
    %v88 = vlaneseq
    %v89 = vshrl.u32 %v88, 7
    %v90 = vsub.s32 %v87, %v89
    %v91 = vrot.slane %v83, %v90
    %v93 = vunpack.c.l.s4 1966171168
    %v94 = vunpack.c.0.s8 %v93
    %v95 = vlaneseq
    %v96 = vshrl.u32 %v95, 7
    %v97 = vsub.s32 %v94, %v96
    %v98 = vrot.slane %v84, %v97
    %v99 = vcombine.low %v91, %v98
    %v101 = vunpack.c.l.s4 1966171168
    %v102 = vunpack.c.0.s8 %v101
    %v103 = vlaneseq
    %v104 = vshrl.u32 %v103, 7
    %v105 = vsub.s32 %v102, %v104
    %v106 = vrot.slane %v99, %v105
    %v108 = vlaneseq
    %vm109 = vcmp.ge.s32.totalorder %v108, 0
    %vm110 = vcmp.lt.s32.totalorder %v108, 512
    %vm111 = vmand %vm109, %vm110
    %112 = vst.msk [vmem:[#allocation7] sm:$0xf] %vm111, %v106
    // Predicated region
    $region18: #{tpu_custom_call.1} parent=1 // pred_check
      _
    $region19: #{tpu_custom_call.1} parent=1 // pred_check_branch
      %114 = sbr.rel (0) target = $region21
    $region20: #{tpu_custom_call.1} parent=1 // pred_region
      %s116 = ssub.s32 64, 64
      %117 = vsyncadd [#allocation4], %s116
      %s119 = sshll.u32 [#allocation7], 4
      %s120 = int_to_ptr.vmem [resolvable:$true] %s119
      %122 = dma.vmem_to_hbm [thread:$0]  %s120, 64, %s2, [#allocation4]
    $region21: #{tpu_custom_call.1} parent=1 // pred_fallthru
      _
    // Predicated region
    $region22: #{tpu_custom_call.1} parent=1 // pred_check
      _
    $region23: #{tpu_custom_call.1} parent=1 // pred_check_branch
      %124 = sbr.rel (0) target = $region25
    $region24: #{tpu_custom_call.1} parent=1 // pred_region
      %125 = dma.done [#allocation4], 64
    $region25: #{tpu_custom_call.1} parent=1 // pred_fallthru
      _
    %126 = vsyncpa [#allocation3], 1
    %127 = vsyncpa [#allocation6], 1
    %128 = vsyncpa [#allocation4], 1

</llo_original>
